<compile_context>
chip_gen: v7x
topology: tpu7x:2x2x1
jax: 0.10.0
libtpu: 0.0.40
codegen_flags: <defaults>
</compile_context>

<pallas_src>
import jax
import jax.numpy as jnp
from jax.experimental import pallas as pl
from jax.experimental.pallas import tpu as pltpu


# ----------------------------- schedules (buffers from __init__) --------------

def linear_beta_schedule(timesteps: int, start: float = 1e-6, end: float = 0.01):
    return jnp.linspace(start, end, timesteps, dtype=jnp.float32)


def cosine_beta_schedule(timesteps: int, s: float = 0.008):
    steps = timesteps + 1
    x = jnp.linspace(0.0, timesteps, steps, dtype=jnp.float32)
    gammas = jnp.cos(jnp.pi / 2 * (x / timesteps + s) / (1 + s))
    gammas = gammas / gammas[0]
    betas = 1 - gammas[1:] / gammas[:-1]
    return jnp.clip(betas, 0.0001, 0.9999)


def make_schedule_buffers(schedule_type: str, timesteps: int,
                          start: float = 1e-6, end: float = 0.01):
    if schedule_type == "linear":
        betas = linear_beta_schedule(timesteps, start, end)
    elif schedule_type == "cosine":
        betas = cosine_beta_schedule(timesteps)
    else:
        raise ValueError(f"{schedule_type} is not supported.")
    alphas = 1.0 - betas
    gammas = jnp.cumprod(alphas, axis=0)
    gammas_prev = jnp.concatenate([jnp.ones((1,), dtype=gammas.dtype),
                                   gammas[:-1]])
    return alphas, gammas, gammas_prev


# ----------------------------- Pallas kernel ----------------------------------

def _forward_kernel(sqrt_g_ref, sqrt_1mg_ref, mask_ref,
                    y0_ref, noise_ref,
                    y_noised_ref, noise_out_ref):
    # Pure streaming elementwise pass (HBM-bandwidth bound).
    # (BN, 1, 1) scale tiles broadcast over the (BN, 8, TL) data tiles.
    noise = noise_ref[...] * mask_ref[...]
    noise_out_ref[...] = noise
    y_noised_ref[...] = sqrt_g_ref[...] * y0_ref[...] + sqrt_1mg_ref[...] * noise


# ----------------------------- tile selection ---------------------------------

_TARGET_TILE_BYTES = 1 << 20  # ~1 MiB per streamed array tile (portable across
                              # v5e/v6e/v7x; 4 streams x 2 buffers ~= 8 MiB VMEM)


def _largest_divisor_leq(n: int, cap: int) -> int:
    cap = max(1, min(n, cap))
    for d in range(cap, 0, -1):
        if n % d == 0:
            return d
    return 1


def _pick_tiles(n: int, lanes: int, itemsize: int):
    """Return (BN, TL): batch rows per block and lane-tile width."""
    row_bytes = 8 * lanes * itemsize
    if row_bytes <= _TARGET_TILE_BYTES:
        # Small images: pack several batch elements per block.
        bn = _largest_divisor_leq(n, _TARGET_TILE_BYTES // row_bytes)
        return bn, lanes
    # Large images: one batch element per block, tile the lane axis.
    if lanes % 128 != 0:
        return 1, lanes  # full-extent lane block (exception to the 128 rule)
    cap = max(128, (_TARGET_TILE_BYTES // (8 * itemsize) // 128) * 128)
    tl = 128
    for cand in range(cap, 127, -128):
        if lanes % cand == 0:
            tl = cand
            break
    return 1, tl


# ----------------------------- wrapper -----------------------------------------

def diffusion_forward(y_0, t, noise_raw, u, gammas, gammas_prev):
    """y_0: [N,C,H,W] f32 (NCHW), t: [N] int32,
    noise_raw: [N,C,H,W] f32 (pre-mask standard normals), u: [N] f32 uniforms."""
    N, C, H, W = y_0.shape
    D = C * H * W
    assert D % 8 == 0, "C*H*W must be a multiple of 8 for the (8, lanes) view"
    lanes = D // 8
    itemsize = jnp.dtype(y_0.dtype).itemsize

    # ---- O(N) per-batch scalar math, hoisted out of the kernel (plain JAX) ----
    g_prev = gammas_prev[t]
    g_cur = gammas[t]
    gamma = (g_cur - g_prev) * u + g_prev                       # [N]
    mask = (t > 0).astype(y_0.dtype)                            # [N]
    sqrt_g = jnp.sqrt(gamma).astype(y_0.dtype)                  # [N]
    sqrt_1mg = jnp.sqrt(1.0 - gamma).astype(y_0.dtype)          # [N]

    sg_v = sqrt_g.reshape(N, 1, 1)
    s1_v = sqrt_1mg.reshape(N, 1, 1)
    mk_v = mask.reshape(N, 1, 1)

    # ---- lane-dense views of the big tensors (pure reshape of NCHW memory) ----
    y0_v = y_0.reshape(N, 8, lanes)
    noise_v = noise_raw.reshape(N, 8, lanes)

    BN, TL = _pick_tiles(N, lanes, itemsize)
    grid = (N // BN, lanes // TL)

    vspec = pl.BlockSpec((BN, 8, TL), lambda i, j: (i, 0, j))
    sspec = pl.BlockSpec((BN, 1, 1), lambda i, j: (i, 0, 0))

    y_noised, noise_out = pl.pallas_call(
        _forward_kernel,
        grid=grid,
        in_specs=[sspec, sspec, sspec, vspec, vspec],
        out_specs=[vspec, vspec],
        out_shape=(
            jax.ShapeDtypeStruct((N, 8, lanes), y_0.dtype),
            jax.ShapeDtypeStruct((N, 8, lanes), y_0.dtype),
        ),
        compiler_params=pltpu.CompilerParams(
            dimension_semantics=("parallel", "parallel")),
    )(sg_v, s1_v, mk_v, y0_v, noise_v)

    return (y_noised.reshape(N, C, H, W),
            noise_out.reshape(N, C, H, W),
            gamma.reshape(-1))


# ----------------------------- driver / reference -----------------------------

def _reference_forward(y_0, t, noise_raw, u, gammas, gammas_prev):
    g_prev = gammas_prev[t].reshape(-1, 1, 1, 1)
    g_cur = gammas[t].reshape(-1, 1, 1, 1)
    gamma = (g_cur - g_prev) * u.reshape(-1, 1, 1, 1) + g_prev
    noise = noise_raw * (t > 0).reshape(-1, 1, 1, 1).astype(y_0.dtype)
    y_noised = jnp.sqrt(gamma) * y_0 + jnp.sqrt(1.0 - gamma) * noise
    return y_noised, noise, gamma.reshape(-1)


if __name__ == "__main__":
    # Small, module-consistent shapes: N=2, C=4, H=W=16; 100 diffusion steps.
    N, C, H, W = 2, 4, 16, 16
    timesteps = 100

    _, gammas, gammas_prev = make_schedule_buffers("linear", timesteps)

    key = jax.random.PRNGKey(0)
    k_y, k_n, k_u, k_t = jax.random.split(key, 4)
    y_0 = jax.random.normal(k_y, (N, C, H, W), dtype=jnp.float32)
    # torch.randn_like / torch.rand_like have no deterministic JAX twin; the
    # randoms are drawn in JAX and fed to the kernel explicitly.
    noise_raw = jax.random.normal(k_n, (N, C, H, W), dtype=jnp.float32)
    u = jax.random.uniform(k_u, (N,), dtype=jnp.float32)
    t = jnp.array([0, 37], dtype=jnp.int32)  # exercise the (t > 0) mask branch

    y_noised, noise, gamma = diffusion_forward(
        y_0, t, noise_raw, u, gammas, gammas_prev)
    jax.block_until_ready((y_noised, noise, gamma))

    y_ref, n_ref, g_ref = _reference_forward(
        y_0, t, noise_raw, u, gammas, gammas_prev)

    assert jnp.allclose(y_noised, y_ref, atol=1e-5, rtol=1e-5)
    assert jnp.allclose(noise, n_ref, atol=1e-6, rtol=1e-6)
    assert jnp.allclose(gamma, g_ref, atol=1e-6, rtol=1e-6)
    assert y_noised.shape == (N, C, H, W) and gamma.shape == (N,)

    print("KERNEL_OK")
</pallas_src>

<mosaic_0001>
module attributes {stable_mosaic.version = 11 : i64} {
  func.func @_forward_kernel(%arg0: i32, %arg1: i32, %arg2: memref<2x1x1xf32, #tpu.memory_space<vmem>>, %arg3: memref<2x1x1xf32, #tpu.memory_space<vmem>>, %arg4: memref<2x1x1xf32, #tpu.memory_space<vmem>>, %arg5: memref<2x8x128xf32, #tpu.memory_space<vmem>>, %arg6: memref<2x8x128xf32, #tpu.memory_space<vmem>>, %arg7: memref<2x8x128xf32, #tpu.memory_space<vmem>>, %arg8: memref<2x8x128xf32, #tpu.memory_space<vmem>>) attributes {dimension_semantics = [#tpu.dimension_semantics<parallel>, #tpu.dimension_semantics<parallel>], iteration_bounds = array<i64: 1, 1>, scalar_prefetch = 0 : i64, scratch_operands = 0 : i64, tpu.core_type = #tpu.core_type<tc>, window_params = [{transform_indices = @transform_0, window_bounds = array<i64: 2, 1, 1>}, {transform_indices = @transform_1, window_bounds = array<i64: 2, 1, 1>}, {transform_indices = @transform_2, window_bounds = array<i64: 2, 1, 1>}, {transform_indices = @transform_3, window_bounds = array<i64: 2, 8, 128>}, {transform_indices = @transform_4, window_bounds = array<i64: 2, 8, 128>}, {transform_indices = @transform_5, window_bounds = array<i64: 2, 8, 128>}, {transform_indices = @transform_6, window_bounds = array<i64: 2, 8, 128>}]} {
    %c0 = arith.constant 0 : index
    %c0_0 = arith.constant 0 : index
    %c0_1 = arith.constant 0 : index
    %0 = vector.load %arg6[%c0, %c0_0, %c0_1] : memref<2x8x128xf32, #tpu.memory_space<vmem>>, vector<2x8x128xf32>
    %c0_2 = arith.constant 0 : index
    %c0_3 = arith.constant 0 : index
    %c0_4 = arith.constant 0 : index
    %1 = vector.load %arg4[%c0_2, %c0_3, %c0_4] : memref<2x1x1xf32, #tpu.memory_space<vmem>>, vector<2x1x1xf32>
    %2 = vector.broadcast %1 : vector<2x1x1xf32> to vector<2x8x128xf32>
    %3 = arith.mulf %0, %2 : vector<2x8x128xf32>
    %c0_5 = arith.constant 0 : index
    %c0_6 = arith.constant 0 : index
    %c0_7 = arith.constant 0 : index
    %4 = vector.load %arg8[%c0_5, %c0_6, %c0_7] : memref<2x8x128xf32, #tpu.memory_space<vmem>>, vector<2x8x128xf32>
    tpu.vector_store %arg8[%c0_5, %c0_6, %c0_7], %3 {strides = array<i32>} : memref<2x8x128xf32, #tpu.memory_space<vmem>>, vector<2x8x128xf32>,
    %c0_8 = arith.constant 0 : index
    %c0_9 = arith.constant 0 : index
    %c0_10 = arith.constant 0 : index
    %5 = vector.load %arg2[%c0_8, %c0_9, %c0_10] : memref<2x1x1xf32, #tpu.memory_space<vmem>>, vector<2x1x1xf32>
    %c0_11 = arith.constant 0 : index
    %c0_12 = arith.constant 0 : index
    %c0_13 = arith.constant 0 : index
    %6 = vector.load %arg5[%c0_11, %c0_12, %c0_13] : memref<2x8x128xf32, #tpu.memory_space<vmem>>, vector<2x8x128xf32>
    %7 = vector.broadcast %5 : vector<2x1x1xf32> to vector<2x8x128xf32>
    %8 = arith.mulf %7, %6 : vector<2x8x128xf32>
    %c0_14 = arith.constant 0 : index
    %c0_15 = arith.constant 0 : index
    %c0_16 = arith.constant 0 : index
    %9 = vector.load %arg3[%c0_14, %c0_15, %c0_16] : memref<2x1x1xf32, #tpu.memory_space<vmem>>, vector<2x1x1xf32>
    %10 = vector.broadcast %9 : vector<2x1x1xf32> to vector<2x8x128xf32>
    %11 = arith.mulf %10, %3 : vector<2x8x128xf32>
    %12 = arith.addf %8, %11 : vector<2x8x128xf32>
    %c0_17 = arith.constant 0 : index
    %c0_18 = arith.constant 0 : index
    %c0_19 = arith.constant 0 : index
    %13 = vector.load %arg7[%c0_17, %c0_18, %c0_19] : memref<2x8x128xf32, #tpu.memory_space<vmem>>, vector<2x8x128xf32>
    tpu.vector_store %arg7[%c0_17, %c0_18, %c0_19], %12 {strides = array<i32>} : memref<2x8x128xf32, #tpu.memory_space<vmem>>, vector<2x8x128xf32>,
    return
  }
  func.func @transform_0(%arg0: i32, %arg1: i32) -> (i32, i32, i32) {
    %c0_i32 = arith.constant 0 : i32
    %c0_i32_0 = arith.constant 0 : i32
    %c0_i32_1 = arith.constant 0 : i32
    return %arg0, %c0_i32, %c0_i32_0 : i32, i32, i32
  }
  func.func @transform_1(%arg0: i32, %arg1: i32) -> (i32, i32, i32) {
    %c0_i32 = arith.constant 0 : i32
    %c0_i32_0 = arith.constant 0 : i32
    %c0_i32_1 = arith.constant 0 : i32
    return %arg0, %c0_i32, %c0_i32_0 : i32, i32, i32
  }
  func.func @transform_2(%arg0: i32, %arg1: i32) -> (i32, i32, i32) {
    %c0_i32 = arith.constant 0 : i32
    %c0_i32_0 = arith.constant 0 : i32
    %c0_i32_1 = arith.constant 0 : i32
    return %arg0, %c0_i32, %c0_i32_0 : i32, i32, i32
  }
  func.func @transform_3(%arg0: i32, %arg1: i32) -> (i32, i32, i32) {
    %c0_i32 = arith.constant 0 : i32
    %c0_i32_0 = arith.constant 0 : i32
    return %arg0, %c0_i32, %arg1 : i32, i32, i32
  }
  func.func @transform_4(%arg0: i32, %arg1: i32) -> (i32, i32, i32) {
    %c0_i32 = arith.constant 0 : i32
    %c0_i32_0 = arith.constant 0 : i32
    return %arg0, %c0_i32, %arg1 : i32, i32, i32
  }
  func.func @transform_5(%arg0: i32, %arg1: i32) -> (i32, i32, i32) {
    %c0_i32 = arith.constant 0 : i32
    %c0_i32_0 = arith.constant 0 : i32
    return %arg0, %c0_i32, %arg1 : i32, i32, i32
  }
  func.func @transform_6(%arg0: i32, %arg1: i32) -> (i32, i32, i32) {
    %c0_i32 = arith.constant 0 : i32
    %c0_i32_0 = arith.constant 0 : i32
    return %arg0, %c0_i32, %arg1 : i32, i32, i32
  }
}

</mosaic_0001>

<llo_original>
// kernel: tpu_custom_call.1
$region0: #{tpu_custom_call.1}
  #allocation0 [shape = 'u32[]', space=smem, size = 0x4, offset = 0x4, fixed_abs, tag = 'smem constant byte address 0x4 - core index']
  #allocation1 [shape = 'u32[144,128]{1,0:T(1,128)}', space=vmem, size = 0x12000, scoped, tag = 'internal scratch']
  %s0 = inlined_call_operand.vmem [shape: f32[2,1,1], index: 0, kind: input, shape index: {}]
  %s1 = inlined_call_operand.vmem [shape: f32[2,1,1], index: 1, kind: input, shape index: {}]
  %s2 = inlined_call_operand.vmem [shape: f32[2,1,1], index: 2, kind: input, shape index: {}]
  %s3 = inlined_call_operand.vmem [shape: f32[2,8,128], index: 3, kind: input, shape index: {}]
  %s4 = inlined_call_operand.hbm [shape: f32[2,8,128], index: 4, kind: input, shape index: {}]
  %s5 = inlined_call_operand.hbm [shape: f32[2,8,128], index: 5, kind: output, shape index: {0}]
  %s6 = inlined_call_operand.hbm [shape: f32[2,8,128], index: 6, kind: output, shape index: {1}]
  %7 = xla_tuple %s5, %s6
  %s8 = sld [smem:[#allocation0]]
  $region42: #{tpu_custom_call.1} parent=0
    _
  %s10 = ssub.s32 1, %s8
  %s11 = scalar_select 0, %s10, %s8
  $region1: #{tpu_custom_call.1} parent=0
    #allocation2 [shape = 'u8[8192]{0}', space=vmem, size = 0x2000, scoped, tag = 'input window, operand 4, single buffered']
    #allocation3 [shape = 's32[1]{0}', space=sflag, size = 0x4, scoped, tag = 'scoped memory for tpu_custom_call.1']
    #allocation4 [shape = 's32[1]{0}', space=sflag, size = 0x4, scoped, tag = 'scoped memory for tpu_custom_call.1']
    #allocation5 [shape = 'u8[8192]{0}', space=vmem, size = 0x2000, scoped, tag = 'output window, operand 0, single buffered']
    #allocation6 [shape = 'u8[8192]{0}', space=vmem, size = 0x2000, scoped, tag = 'output window, operand 1, single buffered']
    #allocation7 [shape = 's32[1]{0}', space=sflag, size = 0x4, scoped, tag = 'scoped memory for tpu_custom_call.1']
    %12 = vsyncpa [#allocation3], 0
    %13 = vsyncpa [#allocation4], 0
    %14 = vsyncpa [#allocation7], 0
    // Predicated region
    $region2: #{tpu_custom_call.1} parent=1 // pred_check
      _
    $region3: #{tpu_custom_call.1} parent=1 // pred_check_branch
      %16 = sbr.rel (0) target = $region5
    $region4: #{tpu_custom_call.1} parent=1 // pred_region
      _
    $region5: #{tpu_custom_call.1} parent=1 // pred_fallthru
      _
    // Predicated region
    $region6: #{tpu_custom_call.1} parent=1 // pred_check
      _
    $region7: #{tpu_custom_call.1} parent=1 // pred_check_branch
      %18 = sbr.rel (0) target = $region9
    $region8: #{tpu_custom_call.1} parent=1 // pred_region
      _
    $region9: #{tpu_custom_call.1} parent=1 // pred_fallthru
      _
    // Predicated region
    $region10: #{tpu_custom_call.1} parent=1 // pred_check
      _
    $region11: #{tpu_custom_call.1} parent=1 // pred_check_branch
      %20 = sbr.rel (0) target = $region13
    $region12: #{tpu_custom_call.1} parent=1 // pred_region
      _
    $region13: #{tpu_custom_call.1} parent=1 // pred_fallthru
      _
    // Predicated region
    $region14: #{tpu_custom_call.1} parent=1 // pred_check
      _
    $region15: #{tpu_custom_call.1} parent=1 // pred_check_branch
      %22 = sbr.rel (0) target = $region17
    $region16: #{tpu_custom_call.1} parent=1 // pred_region
      _
    $region17: #{tpu_custom_call.1} parent=1 // pred_fallthru
      _
    // Predicated region
    $region18: #{tpu_custom_call.1} parent=1 // pred_check
      _
    $region19: #{tpu_custom_call.1} parent=1 // pred_check_branch
      %24 = sbr.rel (0) target = $region21
    $region20: #{tpu_custom_call.1} parent=1 // pred_region
      %s26 = ssub.s32 256, 256
      %27 = vsyncadd [#allocation3], %s26
      %s28 = sshll.u32 [#allocation2], 4
      %s29 = int_to_ptr.vmem [resolvable:$true] %s28
      %34 = dma.hbm_to_vmem [thread:$0]  %s4, 256, %s29, [#allocation3], 128, 128, 8
    $region21: #{tpu_custom_call.1} parent=1 // pred_fallthru
      _
    // Predicated region
    $region22: #{tpu_custom_call.1} parent=1 // pred_check
      _
    $region23: #{tpu_custom_call.1} parent=1 // pred_check_branch
      %36 = sbr.rel (0) target = $region25
    $region24: #{tpu_custom_call.1} parent=1 // pred_region
      %37 = dma.done [#allocation3], 256
    $region25: #{tpu_custom_call.1} parent=1 // pred_fallthru
      _
    %v38 = vld [vmem:[#allocation2] sm:$0xff]
    %v39 = vld [vmem:[#allocation2 + $0x8] sm:$0xff]
    %v40 = vld [vmem:[%s2] sm:$0x1]
    %v41 = vld [vmem:[%s2 + $0x1] sm:$0x1]
    %v44 = vlaneseq
    %v45 = vshrl.u32 %v44, 7
    %v46 = vsub.s32 0, %v45
    %v47 = vrot.slane %v40, %v46
    %v48 = vlaneseq
    %v49 = vshrl.u32 %v48, 7
    %v50 = vsub.s32 0, %v49
    %v51 = vrot.slane %v41, %v50
    %52 = vset.pattern.permute.xlu0 0
    %53 = vperm.xlu0 %52, %v47
    %v54 = vpop.permute.xlu0 %53
    %56 = vset.pattern.permute.xlu0 0
    %57 = vperm.xlu0 %56, %v51
    %v58 = vpop.permute.xlu0 %57
    %v60 = vmul.f32 %v38, %v54
    %v61 = vmul.f32 %v39, %v58
    %62 = vst [vmem:[#allocation6] sm:$0xff] %v60
    %63 = vst [vmem:[#allocation6 + $0x8] sm:$0xff] %v61
    %v64 = vld [vmem:[%s0] sm:$0x1]
    %v65 = vld [vmem:[%s0 + $0x1] sm:$0x1]
    %v66 = vld [vmem:[%s3] sm:$0xff]
    %v67 = vld [vmem:[%s3 + $0x8] sm:$0xff]
    %v70 = vlaneseq
    %v71 = vshrl.u32 %v70, 7
    %v72 = vsub.s32 0, %v71
    %v73 = vrot.slane %v64, %v72
    %v74 = vlaneseq
    %v75 = vshrl.u32 %v74, 7
    %v76 = vsub.s32 0, %v75
    %v77 = vrot.slane %v65, %v76
    %78 = vset.pattern.permute.xlu0 0
    %79 = vperm.xlu0 %78, %v73
    %v80 = vpop.permute.xlu0 %79
    %82 = vset.pattern.permute.xlu0 0
    %83 = vperm.xlu0 %82, %v77
    %v84 = vpop.permute.xlu0 %83
    %v86 = vmul.f32 %v80, %v66
    %v87 = vmul.f32 %v84, %v67
    %v88 = vld [vmem:[%s1] sm:$0x1]
    %v89 = vld [vmem:[%s1 + $0x1] sm:$0x1]
    %v92 = vlaneseq
    %v93 = vshrl.u32 %v92, 7
    %v94 = vsub.s32 0, %v93
    %v95 = vrot.slane %v88, %v94
    %v96 = vlaneseq
    %v97 = vshrl.u32 %v96, 7
    %v98 = vsub.s32 0, %v97
    %v99 = vrot.slane %v89, %v98
    %100 = vset.pattern.permute.xlu0 0
    %101 = vperm.xlu0 %100, %v95
    %v102 = vpop.permute.xlu0 %101
    %104 = vset.pattern.permute.xlu0 0
    %105 = vperm.xlu0 %104, %v99
    %v106 = vpop.permute.xlu0 %105
    %v108 = vmul.f32 %v102, %v60
    %v109 = vmul.f32 %v106, %v61
    %v110 = vadd.f32 %v86, %v108
    %v111 = vadd.f32 %v87, %v109
    %112 = vst [vmem:[#allocation5] sm:$0xff] %v110
    %113 = vst [vmem:[#allocation5 + $0x8] sm:$0xff] %v111
    // Predicated region
    $region26: #{tpu_custom_call.1} parent=1 // pred_check
      _
    $region27: #{tpu_custom_call.1} parent=1 // pred_check_branch
      %115 = sbr.rel (0) target = $region29
    $region28: #{tpu_custom_call.1} parent=1 // pred_region
      %s117 = ssub.s32 256, 256
      %118 = vsyncadd [#allocation4], %s117
      %s119 = sshll.u32 [#allocation5], 4
      %s120 = int_to_ptr.vmem [resolvable:$true] %s119
      %125 = dma.vmem_to_hbm [thread:$0]  %s120, 256, %s5, [#allocation4], 128, 128, 8
    $region29: #{tpu_custom_call.1} parent=1 // pred_fallthru
      _
    // Predicated region
    $region30: #{tpu_custom_call.1} parent=1 // pred_check
      _
    $region31: #{tpu_custom_call.1} parent=1 // pred_check_branch
      %127 = sbr.rel (0) target = $region33
    $region32: #{tpu_custom_call.1} parent=1 // pred_region
      %s129 = ssub.s32 256, 256
      %130 = vsyncadd [#allocation7], %s129
      %s131 = sshll.u32 [#allocation6], 4
      %s132 = int_to_ptr.vmem [resolvable:$true] %s131
      %137 = dma.vmem_to_hbm [thread:$0]  %s132, 256, %s6, [#allocation7], 128, 128, 8
    $region33: #{tpu_custom_call.1} parent=1 // pred_fallthru
      _
    // Predicated region
    $region34: #{tpu_custom_call.1} parent=1 // pred_check
      _
    $region35: #{tpu_custom_call.1} parent=1 // pred_check_branch
      %139 = sbr.rel (0) target = $region37
    $region36: #{tpu_custom_call.1} parent=1 // pred_region
      %140 = dma.done [#allocation4], 256
    $region37: #{tpu_custom_call.1} parent=1 // pred_fallthru
      _
    // Predicated region
    $region38: #{tpu_custom_call.1} parent=1 // pred_check
      _
    $region39: #{tpu_custom_call.1} parent=1 // pred_check_branch
      %142 = sbr.rel (0) target = $region41
    $region40: #{tpu_custom_call.1} parent=1 // pred_region
      %143 = dma.done [#allocation7], 256
    $region41: #{tpu_custom_call.1} parent=1 // pred_fallthru
      _
    %144 = vsyncpa [#allocation3], 1
    %145 = vsyncpa [#allocation4], 1
    %146 = vsyncpa [#allocation7], 1

</llo_original>
